<compile_context>
chip_gen: v7x
topology: tpu7x:2x2x1
jax: 0.10.0
libtpu: 0.0.40
codegen_flags: <defaults>
</compile_context>

<pallas_src>
import math

import jax
import jax.numpy as jnp
from jax.experimental import pallas as pl
from jax.experimental.pallas import tpu as pltpu


def _round_up(x: int, m: int) -> int:
    return ((x + m - 1) // m) * m


def _vmem_budget_bytes() -> int:
    """Usable VMEM budget (bytes): 7/8 of physical, conservative fallback."""
    cap = None
    try:
        info = pltpu.get_tpu_info()
        for name in ("vmem_capacity_bytes", "vmem_size_bytes", "vmem_bytes"):
            cap = getattr(info, name, None)
            if cap:
                break
    except Exception:
        cap = None
    if not cap:
        cap = 64 * 1024 * 1024  # v7x per-TC VMEM — safe everywhere
    return int(cap) * 7 // 8


# ----------------------------- tile selection ------------------------------

_TM_CANDIDATES = (1024, 768, 512, 384, 256, 128, 64, 32, 16)
_TF_CANDIDATES = (1024, 512, 256, 128)


def _fast_cost(tm, E_pad, F_pad, out_bytes):
    return (2 * 2 * E_pad * F_pad * 2          # W1 + W2 bf16 (double-buffered)
            + 2 * tm * E_pad * 2               # x tile bf16 (double-buffered)
            + 2 * tm * E_pad * out_bytes       # out tile (double-buffered)
            + tm * F_pad * (4 + 2)             # f32 hidden + its bf16 cast
            + 2 * E_pad * 4)                   # bias


def _tiled_cost(tm, tf, E_pad, out_bytes):
    return (2 * tm * E_pad * 2                 # x tile (double-buffered)
            + 2 * 2 * E_pad * tf * 2           # W1 + W2 slices (double-buffered)
            + 2 * tm * E_pad * out_bytes       # out tile (double-buffered)
            + tm * E_pad * 4                   # f32 accumulator scratch
            + tm * tf * (4 + 2)                # f32 hidden + its bf16 cast
            + 2 * E_pad * 4)                   # bias


def _choose_config(E_pad, F_pad, out_bytes, vmem_budget, *, force_tiled=False):
    """Returns (tm_max, tf).  tf is None for the weights-resident fast path."""
    if not force_tiled:
        # Weights-resident fast path: W1/W2 read from HBM exactly once.
        for tm in _TM_CANDIDATES:
            if tm < 256:
                break  # below this, prefer the tiled path's larger tm instead
            if _fast_cost(tm, E_pad, F_pad, out_bytes) <= vmem_budget:
                return tm, None
    # F-tiled accumulator path. Arithmetic intensity vs weight streaming is
    # ~tm flops/byte, so maximize tm first, then tf.
    for tm in _TM_CANDIDATES:
        for tf in _TF_CANDIDATES:
            if tf > F_pad:
                continue
            if _tiled_cost(tm, tf, E_pad, out_bytes) <= vmem_budget:
                return tm, tf
    return 16, 128  # last resort (astronomically large E only)


# -------------------------------- kernels ----------------------------------

def _ffn_fused_kernel(x_ref, w1_ref, w2_ref, b2_ref, o_ref):
    # x_ref: (tm, E)  bf16; w1_ref: (E, F) bf16; w2_ref: (F, E) bf16 (resident)
    h = jnp.dot(x_ref[...], w1_ref[...], preferred_element_type=jnp.float32)
    h = h * jax.nn.sigmoid(h)  # SiLU in f32 (EUP sigmoid + VPU mul)
    y = jnp.dot(h.astype(w2_ref.dtype), w2_ref[...],
                preferred_element_type=jnp.float32)
    o_ref[...] = (y + b2_ref[...]).astype(o_ref.dtype)


def _ffn_tiled_kernel(x_ref, w1_ref, w2_ref, b2_ref, o_ref, acc_ref):
    # x_ref:   (tm, E)  bf16 token tile
    # w1_ref:  (E, tf)  bf16 contiguous slab f of W1
    # w2_ref:  (tf, E)  bf16 row slice f of W2
    # b2_ref:  (1, E)   f32 bias
    # acc_ref: (tm, E)  f32 accumulator, resident across the f axis
    f = pl.program_id(1)

    h = jnp.dot(x_ref[...], w1_ref[...], preferred_element_type=jnp.float32)
    h = h * jax.nn.sigmoid(h)
    part = jnp.dot(h.astype(w2_ref.dtype), w2_ref[...],
                   preferred_element_type=jnp.float32)

    @pl.when(f == 0)
    def _():
        # Seed with bias + first partial: no zero-fill, no final bias add.
        acc_ref[...] = part + b2_ref[...]

    @pl.when(f != 0)
    def _():
        acc_ref[...] = acc_ref[...] + part

    @pl.when(f == pl.num_programs(1) - 1)
    def _():
        o_ref[...] = acc_ref[...].astype(o_ref.dtype)


# -------------------------------- wrapper -----------------------------------

class PositionwiseFeedForwardPallas:
    """Functional equivalent of the PyTorch module.

    Weight padding, bf16 cast and slab layout are done ONCE here (hoisted out
    of the forward path).  out_dtype=None keeps the input dtype (module
    semantics); pass jnp.bfloat16 to halve output HBM writeback.
    """

    def __init__(self, w1, w2, b2, *, out_dtype=None, force_tiled=False):
        E, F = w1.shape
        assert w2.shape == (F, E) and b2.shape == (E,)
        self.E, self.F = E, F
        self.out_dtype = out_dtype

        E_pad = _round_up(E, 128)
        F_pad128 = _round_up(F, 128)
        out_bytes = 4 if out_dtype is None else jnp.dtype(out_dtype).itemsize

        self.vmem_limit = _vmem_budget_bytes()
        tm_max, tf = _choose_config(E_pad, F_pad128, out_bytes,
                                    self.vmem_limit, force_tiled=force_tiled)
        self.tm_max, self.tf, self.E_pad = tm_max, tf, E_pad

        if tf is None:
            # Fast path: weights stay (E_pad, F_pad) / (F_pad, E_pad), resident.
            F_pad = F_pad128
            self.w1p = jnp.pad(
                w1, ((0, E_pad - E), (0, F_pad - F))).astype(jnp.bfloat16)
        else:
            F_pad = _round_up(F, tf)
            w1p = jnp.pad(
                w1, ((0, E_pad - E), (0, F_pad - F))).astype(jnp.bfloat16)
            # One contiguous HBM slab per hidden tile: (nf, E_pad, tf).
            self.w1p = w1p.reshape(E_pad, F_pad // tf, tf).transpose(1, 0, 2)
        self.F_pad = F_pad
        self.w2p = jnp.pad(
            w2, ((0, F_pad - F), (0, E_pad - E))).astype(jnp.bfloat16)
        self.b2p = jnp.pad(
            b2.astype(jnp.float32), (0, E_pad - E)).reshape(1, E_pad)

    def __call__(self, x):
        *lead, E = x.shape
        assert E == self.E
        M = int(math.prod(lead)) if lead else 1
        out_dtype = self.out_dtype if self.out_dtype is not None else x.dtype

        tm = min(self.tm_max, _round_up(M, 16))   # 16-row multiples for bf16
        M_pad = _round_up(M, tm)
        E_pad = self.E_pad

        x2d = x.reshape(M, E)
        if x2d.dtype != jnp.bfloat16:
            x2d = x2d.astype(jnp.bfloat16)
        if M_pad != M or E_pad != E:               # skip pad in aligned case
            x2d = jnp.pad(x2d, ((0, M_pad - M), (0, E_pad - E)))

        if self.tf is None:
            out = self._call_fused(x2d, M_pad, tm, out_dtype)
        else:
            out = self._call_tiled(x2d, M_pad, tm, out_dtype)

        if M_pad != M or E_pad != E:               # skip slice in aligned case
            out = out[:M, :E]
        return out.reshape(*lead, E)

    def _call_fused(self, x2d, M_pad, tm, out_dtype):
        E_pad, F_pad = self.E_pad, self.F_pad
        return pl.pallas_call(
            _ffn_fused_kernel,
            out_shape=jax.ShapeDtypeStruct((M_pad, E_pad), out_dtype),
            grid_spec=pltpu.PrefetchScalarGridSpec(
                num_scalar_prefetch=0,
                grid=(M_pad // tm,),
                in_specs=[
                    pl.BlockSpec((tm, E_pad), lambda i: (i, 0)),       # x tile
                    pl.BlockSpec((E_pad, F_pad), lambda i: (0, 0)),    # W1 resident
                    pl.BlockSpec((F_pad, E_pad), lambda i: (0, 0)),    # W2 resident
                    pl.BlockSpec((1, E_pad), lambda i: (0, 0)),        # bias
                ],
                out_specs=pl.BlockSpec((tm, E_pad), lambda i: (i, 0)),
            ),
            compiler_params=pltpu.CompilerParams(
                dimension_semantics=("parallel",),
                vmem_limit_bytes=self.vmem_limit,
            ),
        )(x2d, self.w1p, self.w2p, self.b2p)

    def _call_tiled(self, x2d, M_pad, tm, out_dtype):
        E_pad, F_pad, tf = self.E_pad, self.F_pad, self.tf
        return pl.pallas_call(
            _ffn_tiled_kernel,
            out_shape=jax.ShapeDtypeStruct((M_pad, E_pad), out_dtype),
            grid_spec=pltpu.PrefetchScalarGridSpec(
                num_scalar_prefetch=0,
                grid=(M_pad // tm, F_pad // tf),
                in_specs=[
                    pl.BlockSpec((tm, E_pad), lambda i, f: (i, 0)),          # x tile
                    pl.BlockSpec((None, E_pad, tf), lambda i, f: (f, 0, 0)),  # W1 slab (contiguous)
                    pl.BlockSpec((tf, E_pad), lambda i, f: (f, 0)),           # W2 rows (contiguous)
                    pl.BlockSpec((1, E_pad), lambda i, f: (0, 0)),            # bias
                ],
                out_specs=pl.BlockSpec((tm, E_pad), lambda i, f: (i, 0)),
                scratch_shapes=[pltpu.VMEM((tm, E_pad), jnp.float32)],
            ),
            compiler_params=pltpu.CompilerParams(
                dimension_semantics=("parallel", "arbitrary"),
                vmem_limit_bytes=self.vmem_limit,
            ),
        )(x2d, self.w1p, self.w2p, self.b2p)


# ------------------------------- references ---------------------------------

def ffn_reference_bf16(x, w1, w2, b2):
    # Matches the kernel's numerics (bf16 matmul inputs, f32 accumulation).
    xb = x.astype(jnp.bfloat16)
    h = jnp.dot(xb, w1.astype(jnp.bfloat16), preferred_element_type=jnp.float32)
    h = h * jax.nn.sigmoid(h)
    y = jnp.dot(h.astype(jnp.bfloat16), w2.astype(jnp.bfloat16),
                preferred_element_type=jnp.float32)
    return (y + b2.astype(jnp.float32)).astype(x.dtype)


def ffn_reference_f32(x, w1, w2, b2):
    h = x @ w1
    h = h * jax.nn.sigmoid(h)
    return h @ w2 + b2


if __name__ == "__main__":
    B, S = 2, 8                 # batch, sequence
    dim_embed, dim_pffn = 32, 64

    key = jax.random.PRNGKey(0)
    kx, k1, k2, kb = jax.random.split(key, 4)

    x = jax.random.normal(kx, (B, S, dim_embed), dtype=jnp.float32)
    bound1 = 1.0 / dim_embed ** 0.5
    bound2 = 1.0 / dim_pffn ** 0.5
    w1 = jax.random.uniform(k1, (dim_embed, dim_pffn), jnp.float32, -bound1, bound1)
    w2 = jax.random.uniform(k2, (dim_pffn, dim_embed), jnp.float32, -bound2, bound2)
    b2 = jax.random.uniform(kb, (dim_embed,), jnp.float32, -bound2, bound2)

    y_ref_bf = ffn_reference_bf16(x, w1, w2, b2)
    y_ref_f32 = ffn_reference_f32(x, w1, w2, b2)

    # Default config — at these sizes the weights-resident fast path is chosen.
    ffn = PositionwiseFeedForwardPallas(w1, w2, b2)
    y = jax.block_until_ready(ffn(x))
    assert y.shape == (B, S, dim_embed) and y.dtype == x.dtype
    assert jnp.allclose(y, y_ref_bf, atol=2e-3, rtol=2e-3)
    assert jnp.allclose(y, y_ref_f32, atol=5e-2, rtol=5e-2)

    # Also exercise the F-tiled accumulator path (used for large E/F models).
    ffn_tiled = PositionwiseFeedForwardPallas(w1, w2, b2, force_tiled=True)
    y2 = jax.block_until_ready(ffn_tiled(x))
    assert jnp.allclose(y2, y_ref_bf, atol=2e-3, rtol=2e-3)
    assert jnp.allclose(y2, y_ref_f32, atol=5e-2, rtol=5e-2)

    print("KERNEL_OK")
</pallas_src>

<mosaic_0001>
module attributes {stable_mosaic.version = 11 : i64} {
  func.func @_ffn_fused_kernel(%arg0: i32, %arg1: memref<16x128xbf16, #tpu.memory_space<vmem>>, %arg2: memref<128x128xbf16, #tpu.memory_space<vmem>>, %arg3: memref<128x128xbf16, #tpu.memory_space<vmem>>, %arg4: memref<1x128xf32, #tpu.memory_space<vmem>>, %arg5: memref<16x128xf32, #tpu.memory_space<vmem>>) attributes {dimension_semantics = [#tpu.dimension_semantics<parallel>], iteration_bounds = array<i64: 1>, scalar_prefetch = 0 : i64, scratch_operands = 0 : i64, tpu.core_type = #tpu.core_type<tc>, window_params = [{transform_indices = @transform_0, window_bounds = array<i64: 16, 128>}, {pipeline_mode = #tpu.pipeline_mode<synchronous>, transform_indices = @transform_1, window_bounds = array<i64: 128, 128>}, {pipeline_mode = #tpu.pipeline_mode<synchronous>, transform_indices = @transform_2, window_bounds = array<i64: 128, 128>}, {pipeline_mode = #tpu.pipeline_mode<synchronous>, transform_indices = @transform_3, window_bounds = array<i64: 1, 128>}, {transform_indices = @transform_4, window_bounds = array<i64: 16, 128>}]} {
    %c0 = arith.constant 0 : index
    %c0_0 = arith.constant 0 : index
    %0 = vector.load %arg1[%c0, %c0_0] : memref<16x128xbf16, #tpu.memory_space<vmem>>, vector<16x128xbf16>
    %c0_1 = arith.constant 0 : index
    %c0_2 = arith.constant 0 : index
    %1 = vector.load %arg2[%c0_1, %c0_2] : memref<128x128xbf16, #tpu.memory_space<vmem>>, vector<128x128xbf16>
    %cst = arith.constant dense<0.000000e+00> : vector<16x128xf32>
    %2 = tpu.matmul %0, %1, %cst {dimension_numbers = #tpu.dot_dimension_numbers<[1], [0], [0], [1], [0, 0, 1, 1], [], []>} : vector<16x128xbf16>, vector<128x128xbf16>, vector<16x128xf32> -> vector<16x128xf32>
    %3 = arith.negf %2 : vector<16x128xf32>
    %4 = math.exp %3 : vector<16x128xf32>
    %cst_3 = arith.constant 1.000000e+00 : f32
    %5 = vector.broadcast %cst_3 : f32 to vector<16x128xf32>
    %6 = arith.addf %5, %4 : vector<16x128xf32>
    %7 = arith.divf %5, %6 : vector<16x128xf32>
    %8 = arith.mulf %2, %7 : vector<16x128xf32>
    %9 = arith.truncf %8 : vector<16x128xf32> to vector<16x128xbf16>
    %c0_4 = arith.constant 0 : index
    %c0_5 = arith.constant 0 : index
    %10 = vector.load %arg3[%c0_4, %c0_5] : memref<128x128xbf16, #tpu.memory_space<vmem>>, vector<128x128xbf16>
    %cst_6 = arith.constant dense<0.000000e+00> : vector<16x128xf32>
    %11 = tpu.matmul %9, %10, %cst_6 {dimension_numbers = #tpu.dot_dimension_numbers<[1], [0], [0], [1], [0, 0, 1, 1], [], []>} : vector<16x128xbf16>, vector<128x128xbf16>, vector<16x128xf32> -> vector<16x128xf32>
    %c0_7 = arith.constant 0 : index
    %c0_8 = arith.constant 0 : index
    %12 = vector.load %arg4[%c0_7, %c0_8] : memref<1x128xf32, #tpu.memory_space<vmem>>, vector<1x128xf32>
    %13 = vector.broadcast %12 : vector<1x128xf32> to vector<16x128xf32>
    %14 = arith.addf %11, %13 : vector<16x128xf32>
    %c0_9 = arith.constant 0 : index
    %c0_10 = arith.constant 0 : index
    %15 = vector.load %arg5[%c0_9, %c0_10] : memref<16x128xf32, #tpu.memory_space<vmem>>, vector<16x128xf32>
    tpu.vector_store %arg5[%c0_9, %c0_10], %14 {strides = array<i32>} : memref<16x128xf32, #tpu.memory_space<vmem>>, vector<16x128xf32>,
    return
  }
  func.func @transform_0(%arg0: i32) -> (i32, i32) {
    %c0_i32 = arith.constant 0 : i32
    %c0_i32_0 = arith.constant 0 : i32
    return %arg0, %c0_i32 : i32, i32
  }
  func.func @transform_1(%arg0: i32) -> (i32, i32) {
    %c0_i32 = arith.constant 0 : i32
    %c0_i32_0 = arith.constant 0 : i32
    %c0_i32_1 = arith.constant 0 : i32
    return %c0_i32, %c0_i32_0 : i32, i32
  }
  func.func @transform_2(%arg0: i32) -> (i32, i32) {
    %c0_i32 = arith.constant 0 : i32
    %c0_i32_0 = arith.constant 0 : i32
    %c0_i32_1 = arith.constant 0 : i32
    return %c0_i32, %c0_i32_0 : i32, i32
  }
  func.func @transform_3(%arg0: i32) -> (i32, i32) {
    %c0_i32 = arith.constant 0 : i32
    %c0_i32_0 = arith.constant 0 : i32
    %c0_i32_1 = arith.constant 0 : i32
    return %c0_i32, %c0_i32_0 : i32, i32
  }
  func.func @transform_4(%arg0: i32) -> (i32, i32) {
    %c0_i32 = arith.constant 0 : i32
    %c0_i32_0 = arith.constant 0 : i32
    return %arg0, %c0_i32 : i32, i32
  }
}

</mosaic_0001>

<llo_original>
// kernel: tpu_custom_call.1
$region0: #{tpu_custom_call.1}
  #allocation0 [shape = 'u32[]', space=smem, size = 0x4, offset = 0x4, fixed_abs, tag = 'smem constant byte address 0x4 - core index']
  #allocation1 [shape = 'u32[144,128]{1,0:T(1,128)}', space=vmem, size = 0x12000, scoped, tag = 'internal scratch']
  %s0 = inlined_call_operand.hbm [shape: bf16[16,128], index: 0, kind: input, shape index: {}]
  %s1 = inlined_call_operand.hbm [shape: bf16[128,128], index: 1, kind: input, shape index: {}]
  %s2 = inlined_call_operand.hbm [shape: bf16[128,128], index: 2, kind: input, shape index: {}]
  %s3 = inlined_call_operand.vmem [shape: f32[1,128], index: 3, kind: input, shape index: {}]
  %s4 = inlined_call_operand.hbm [shape: f32[16,128], index: 4, kind: output, shape index: {}]
  %s5 = sld [smem:[#allocation0]]
  $region38: #{tpu_custom_call.1} parent=0
    _
  %s7 = ssub.s32 1, %s5
  %s8 = scalar_select 0, %s7, %s5
  $region1: #{tpu_custom_call.1} parent=0
    #allocation2 [shape = 'u8[4096]{0}', space=vmem, size = 0x1000, scoped, tag = 'input window, operand 0, single buffered']
    #allocation3 [shape = 's32[1]{0}', space=sflag, size = 0x4, scoped, tag = 'scoped memory for tpu_custom_call.1']
    #allocation4 [shape = 's32[1]{0}', space=sflag, size = 0x4, scoped, tag = 'scoped memory for tpu_custom_call.1']
    #allocation5 [shape = 'u8[32768]{0}', space=vmem, size = 0x8000, scoped, tag = 'input window, operand 1, single buffered']
    #allocation6 [shape = 's32[1]{0}', space=sflag, size = 0x4, scoped, tag = 'scoped memory for tpu_custom_call.1']
    #allocation7 [shape = 'u8[32768]{0}', space=vmem, size = 0x8000, scoped, tag = 'input window, operand 2, single buffered']
    #allocation8 [shape = 'u8[8192]{0}', space=vmem, size = 0x2000, scoped, tag = 'output window, operand 0, single buffered']
    %9 = vsyncpa [#allocation3], 0
    %10 = vsyncpa [#allocation6], 0
    %11 = vsyncpa [#allocation4], 0
    // Predicated region
    $region2: #{tpu_custom_call.1} parent=1 // pred_check
      _
    $region3: #{tpu_custom_call.1} parent=1 // pred_check_branch
      %13 = sbr.rel (0) target = $region5
    $region4: #{tpu_custom_call.1} parent=1 // pred_region
      %s15 = ssub.s32 128, 128
      %16 = vsyncadd [#allocation3], %s15
      %s17 = sshll.u32 [#allocation2], 4
      %s18 = int_to_ptr.vmem [resolvable:$true] %s17
      %23 = dma.hbm_to_vmem [thread:$0]  %s0, 128, %s18, [#allocation3], 64, 64, 4
    $region5: #{tpu_custom_call.1} parent=1 // pred_fallthru
      _
    // Predicated region
    $region6: #{tpu_custom_call.1} parent=1 // pred_check
      _
    $region7: #{tpu_custom_call.1} parent=1 // pred_check_branch
      %25 = sbr.rel (0) target = $region9
    $region8: #{tpu_custom_call.1} parent=1 // pred_region
      %s27 = ssub.s32 1024, 1024
      %28 = vsyncadd [#allocation6], %s27
      %s29 = sshll.u32 [#allocation5], 4
      %s30 = int_to_ptr.vmem [resolvable:$true] %s29
      %35 = dma.hbm_to_vmem [thread:$0]  %s1, 1024, %s30, [#allocation6], 64, 64, 4
    $region9: #{tpu_custom_call.1} parent=1 // pred_fallthru
      _
    // Predicated region
    $region10: #{tpu_custom_call.1} parent=1 // pred_check
      _
    $region11: #{tpu_custom_call.1} parent=1 // pred_check_branch
      %37 = sbr.rel (0) target = $region13
    $region12: #{tpu_custom_call.1} parent=1 // pred_region
      %s39 = ssub.s32 1024, 1024
      %40 = vsyncadd [#allocation6], %s39
      %s41 = sshll.u32 [#allocation7], 4
      %s42 = int_to_ptr.vmem [resolvable:$true] %s41
      %47 = dma.hbm_to_vmem [thread:$0]  %s2, 1024, %s42, [#allocation6], 64, 64, 4
    $region13: #{tpu_custom_call.1} parent=1 // pred_fallthru
      _
    // Predicated region
    $region14: #{tpu_custom_call.1} parent=1 // pred_check
      _
    $region15: #{tpu_custom_call.1} parent=1 // pred_check_branch
      %49 = sbr.rel (0) target = $region17
    $region16: #{tpu_custom_call.1} parent=1 // pred_region
      _
    $region17: #{tpu_custom_call.1} parent=1 // pred_fallthru
      _
    // Predicated region
    $region18: #{tpu_custom_call.1} parent=1 // pred_check
      _
    $region19: #{tpu_custom_call.1} parent=1 // pred_check_branch
      %51 = sbr.rel (0) target = $region21
    $region20: #{tpu_custom_call.1} parent=1 // pred_region
      %52 = dma.done [#allocation3], 128
    $region21: #{tpu_custom_call.1} parent=1 // pred_fallthru
      _
    // Predicated region
    $region22: #{tpu_custom_call.1} parent=1 // pred_check
      _
    $region23: #{tpu_custom_call.1} parent=1 // pred_check_branch
      %54 = sbr.rel (0) target = $region25
    $region24: #{tpu_custom_call.1} parent=1 // pred_region
      %55 = dma.done [#allocation6], 1024
    $region25: #{tpu_custom_call.1} parent=1 // pred_fallthru
      _
    // Predicated region
    $region26: #{tpu_custom_call.1} parent=1 // pred_check
      _
    $region27: #{tpu_custom_call.1} parent=1 // pred_check_branch
      %57 = sbr.rel (0) target = $region29
    $region28: #{tpu_custom_call.1} parent=1 // pred_region
      %58 = dma.done [#allocation6], 1024
    $region29: #{tpu_custom_call.1} parent=1 // pred_fallthru
      _
    %v60 = vld [vmem:[#allocation2] sm:$0xf]
    %v61 = vld [vmem:[#allocation2 + $0x4] sm:$0xf]
    %v62 = vld [vmem:[#allocation5] sm:$0xf]
    %v63 = vld [vmem:[#allocation5 + $0x4] sm:$0xf]
    %v64 = vld [vmem:[#allocation5 + $0x8] sm:$0xf]
    %v65 = vld [vmem:[#allocation5 + $0xc] sm:$0xf]
    %v66 = vld [vmem:[#allocation5 + $0x10] sm:$0xf]
    %v67 = vld [vmem:[#allocation5 + $0x14] sm:$0xf]
    %v68 = vld [vmem:[#allocation5 + $0x18] sm:$0xf]
    %v69 = vld [vmem:[#allocation5 + $0x1c] sm:$0xf]
    %v70 = vld [vmem:[#allocation5 + $0x20] sm:$0xf]
    %v71 = vld [vmem:[#allocation5 + $0x24] sm:$0xf]
    %v72 = vld [vmem:[#allocation5 + $0x28] sm:$0xf]
    %v73 = vld [vmem:[#allocation5 + $0x2c] sm:$0xf]
    %v74 = vld [vmem:[#allocation5 + $0x30] sm:$0xf]
    %v75 = vld [vmem:[#allocation5 + $0x34] sm:$0xf]
    %v76 = vld [vmem:[#allocation5 + $0x38] sm:$0xf]
    %v77 = vld [vmem:[#allocation5 + $0x3c] sm:$0xf]
    %v80 = vunpack.c.l.b16 %v60
    %v81 = vunpack.c.l.b16 %v61
    %v82 = vpack.c.b16 %v81, %v80
    %v100 = vunpack.c.l.b16 %v62
    %v101 = vunpack.c.l.b16 %v63
    %v102 = vunpack.c.l.b16 %v64
    %v103 = vunpack.c.l.b16 %v65
    %v104 = vunpack.c.l.b16 %v66
    %v105 = vunpack.c.l.b16 %v67
    %v106 = vunpack.c.l.b16 %v68
    %v107 = vunpack.c.l.b16 %v69
    %v108 = vunpack.c.l.b16 %v70
    %v109 = vunpack.c.l.b16 %v71
    %v110 = vunpack.c.l.b16 %v72
    %v111 = vunpack.c.l.b16 %v73
    %v112 = vunpack.c.l.b16 %v74
    %v113 = vunpack.c.l.b16 %v75
    %v114 = vunpack.c.l.b16 %v76
    %v115 = vunpack.c.l.b16 %v77
    %v116 = vpack.c.b16 %v101, %v100
    %v117 = vpack.c.b16 %v103, %v102
    %v118 = vpack.c.b16 %v105, %v104
    %v119 = vpack.c.b16 %v107, %v106
    %v120 = vpack.c.b16 %v109, %v108
    %v121 = vpack.c.b16 %v111, %v110
    %v122 = vpack.c.b16 %v113, %v112
    %v123 = vpack.c.b16 %v115, %v114
    %132 = vmatprep.subr.bf16.mxu0 0
    %133 = vmatpush1.bf16.msra.mxu0 %v116
    %134 = vmatprep.subr.bf16.mxu0 0
    %135 = vmatpush1.bf16.msra.mxu0 %v117
    %136 = vmatprep.subr.bf16.mxu0 0
    %137 = vmatpush1.bf16.msra.mxu0 %v118
    %138 = vmatprep.subr.bf16.mxu0 0
    %139 = vmatpush1.bf16.msra.mxu0 %v119
    %140 = vmatprep.subr.bf16.mxu0 0
    %141 = vmatpush1.bf16.msra.mxu0 %v120
    %142 = vmatprep.subr.bf16.mxu0 0
    %143 = vmatpush1.bf16.msra.mxu0 %v121
    %144 = vmatprep.subr.bf16.mxu0 0
    %145 = vmatpush1.bf16.msra.mxu0 %v122
    %146 = vmatprep.subr.bf16.mxu0 0
    %147 = vmatpush1.bf16.msra.mxu0 %v123
    %148 = vmatprep.subr.bf16.mxu0 0
    %149 = vmatpush1.bf16.msra.mxu0 0
    %150 = vmatprep.subr.bf16.mxu0 0
    %151 = vmatpush1.bf16.msra.mxu0 0
    %152 = vmatprep.subr.bf16.mxu0 0
    %153 = vmatpush1.bf16.msra.mxu0 0
    %154 = vmatprep.subr.bf16.mxu0 0
    %155 = vmatpush1.bf16.msra.mxu0 0
    %156 = vmatprep.subr.bf16.mxu0 0
    %157 = vmatpush1.bf16.msra.mxu0 0
    %158 = vmatprep.subr.bf16.mxu0 0
    %159 = vmatpush1.bf16.msra.mxu0 0
    %160 = vmatprep.subr.bf16.mxu0 0
    %161 = vmatpush1.bf16.msra.mxu0 0
    %162 = vmatprep.subr.bf16.mxu0 0
    %163 = vmatpush1.bf16.msra.mxu0 0
    %164 = vmatprep.mubr.bf16.mxu0 0
    %165 = vmatmul.mubr.bf16.gmra.mrb[0].mxu0 %v82
    %v166 = vpop.f32.mrb[0].mxu0
    %v167 = vadd.f32 0.0, %v166
    %v168 = vpop.f32.mrb[0].mxu0
    %v169 = vpop.f32.mrb[0].mxu0
    %v170 = vadd.f32 0.0, %v169
    %v171 = vpop.f32.mrb[0].mxu0
    %172 = vdwg.mxu0
    %v173 = vxor.u32 %v167, 2147483648
    %v174 = vxor.u32 %v170, 2147483648
    %v175 = vmul.f32 %v173, 1.442695
    %v176 = vpow.pop %v175
    %v177 = vmul.f32 %v174, 1.442695
    %v178 = vpow.pop %v177
    %v179 = vadd.f32 %v176, 1.0
    %v180 = vadd.f32 %v178, 1.0
    %v181 = vrcp.pop %v179
    %v182 = vmul.f32 1.0, %v181
    %v183 = vrcp.pop %v180
    %v184 = vmul.f32 1.0, %v183
    %v185 = vmul.f32 %v167, %v182
    %v186 = vmul.f32 %v170, %v184
    %v187 = vpack.c.bf16 %v186, %v185
    %v188 = vld [vmem:[#allocation7] sm:$0xf]
    %v189 = vld [vmem:[#allocation7 + $0x4] sm:$0xf]
    %v190 = vld [vmem:[#allocation7 + $0x8] sm:$0xf]
    %v191 = vld [vmem:[#allocation7 + $0xc] sm:$0xf]
    %v192 = vld [vmem:[#allocation7 + $0x10] sm:$0xf]
    %v193 = vld [vmem:[#allocation7 + $0x14] sm:$0xf]
    %v194 = vld [vmem:[#allocation7 + $0x18] sm:$0xf]
    %v195 = vld [vmem:[#allocation7 + $0x1c] sm:$0xf]
    %v196 = vld [vmem:[#allocation7 + $0x20] sm:$0xf]
    %v197 = vld [vmem:[#allocation7 + $0x24] sm:$0xf]
    %v198 = vld [vmem:[#allocation7 + $0x28] sm:$0xf]
    %v199 = vld [vmem:[#allocation7 + $0x2c] sm:$0xf]
    %v200 = vld [vmem:[#allocation7 + $0x30] sm:$0xf]
    %v201 = vld [vmem:[#allocation7 + $0x34] sm:$0xf]
    %v202 = vld [vmem:[#allocation7 + $0x38] sm:$0xf]
    %v203 = vld [vmem:[#allocation7 + $0x3c] sm:$0xf]
    %v204 = vld [vmem:[%s3] sm:$0x1]
    %v206 = vlaneseq
    %v207 = vshrl.u32 %v206, 7
    %v208 = vsub.s32 0, %v207
    %v209 = vrot.slane %v204, %v208
    %v227 = vunpack.c.l.b16 %v188
    %v228 = vunpack.c.l.b16 %v189
    %v229 = vunpack.c.l.b16 %v190
    %v230 = vunpack.c.l.b16 %v191
    %v231 = vunpack.c.l.b16 %v192
    %v232 = vunpack.c.l.b16 %v193
    %v233 = vunpack.c.l.b16 %v194
    %v234 = vunpack.c.l.b16 %v195
    %v235 = vunpack.c.l.b16 %v196
    %v236 = vunpack.c.l.b16 %v197
    %v237 = vunpack.c.l.b16 %v198
    %v238 = vunpack.c.l.b16 %v199
    %v239 = vunpack.c.l.b16 %v200
    %v240 = vunpack.c.l.b16 %v201
    %v241 = vunpack.c.l.b16 %v202
    %v242 = vunpack.c.l.b16 %v203
    %v243 = vpack.c.b16 %v228, %v227
    %v244 = vpack.c.b16 %v230, %v229
    %v245 = vpack.c.b16 %v232, %v231
    %v246 = vpack.c.b16 %v234, %v233
    %v247 = vpack.c.b16 %v236, %v235
    %v248 = vpack.c.b16 %v238, %v237
    %v249 = vpack.c.b16 %v240, %v239
    %v250 = vpack.c.b16 %v242, %v241
    %259 = vmatprep.subr.bf16.mxu0 0
    %260 = vmatpush1.bf16.msra.mxu0 %v243
    %261 = vmatprep.subr.bf16.mxu0 0
    %262 = vmatpush1.bf16.msra.mxu0 %v244
    %263 = vmatprep.subr.bf16.mxu0 0
    %264 = vmatpush1.bf16.msra.mxu0 %v245
    %265 = vmatprep.subr.bf16.mxu0 0
    %266 = vmatpush1.bf16.msra.mxu0 %v246
    %267 = vmatprep.subr.bf16.mxu0 0
    %268 = vmatpush1.bf16.msra.mxu0 %v247
    %269 = vmatprep.subr.bf16.mxu0 0
    %270 = vmatpush1.bf16.msra.mxu0 %v248
    %271 = vmatprep.subr.bf16.mxu0 0
    %272 = vmatpush1.bf16.msra.mxu0 %v249
    %273 = vmatprep.subr.bf16.mxu0 0
    %274 = vmatpush1.bf16.msra.mxu0 %v250
    %275 = vmatprep.subr.bf16.mxu0 0
    %276 = vmatpush1.bf16.msra.mxu0 0
    %277 = vmatprep.subr.bf16.mxu0 0
    %278 = vmatpush1.bf16.msra.mxu0 0
    %279 = vmatprep.subr.bf16.mxu0 0
    %280 = vmatpush1.bf16.msra.mxu0 0
    %281 = vmatprep.subr.bf16.mxu0 0
    %282 = vmatpush1.bf16.msra.mxu0 0
    %283 = vmatprep.subr.bf16.mxu0 0
    %284 = vmatpush1.bf16.msra.mxu0 0
    %285 = vmatprep.subr.bf16.mxu0 0
    %286 = vmatpush1.bf16.msra.mxu0 0
    %287 = vmatprep.subr.bf16.mxu0 0
    %288 = vmatpush1.bf16.msra.mxu0 0
    %289 = vmatprep.subr.bf16.mxu0 0
    %290 = vmatpush1.bf16.msra.mxu0 0
    %291 = vmatprep.mubr.bf16.mxu0 0
    %292 = vmatmul.mubr.bf16.gmra.mrb[0].mxu0 %v187
    %v293 = vpop.f32.mrb[0].mxu0
    %v294 = vadd.f32 %v209, %v293
    %v295 = vpop.f32.mrb[0].mxu0
    %v296 = vpop.f32.mrb[0].mxu0
    %v297 = vadd.f32 %v209, %v296
    %v298 = vpop.f32.mrb[0].mxu0
    %299 = vdwg.mxu0
    %300 = vst [vmem:[#allocation8] sm:$0xff] %v294
    %301 = vst [vmem:[#allocation8 + $0x8] sm:$0xff] %v297
    // Predicated region
    $region30: #{tpu_custom_call.1} parent=1 // pred_check
      _
    $region31: #{tpu_custom_call.1} parent=1 // pred_check_branch
      %303 = sbr.rel (0) target = $region33
    $region32: #{tpu_custom_call.1} parent=1 // pred_region
      %s305 = ssub.s32 256, 256
      %306 = vsyncadd [#allocation4], %s305
      %s307 = sshll.u32 [#allocation8], 4
      %s308 = int_to_ptr.vmem [resolvable:$true] %s307
      %313 = dma.vmem_to_hbm [thread:$0]  %s308, 256, %s4, [#allocation4], 128, 128, 8
    $region33: #{tpu_custom_call.1} parent=1 // pred_fallthru
      _
    // Predicated region
    $region34: #{tpu_custom_call.1} parent=1 // pred_check
      _
    $region35: #{tpu_custom_call.1} parent=1 // pred_check_branch
      %315 = sbr.rel (0) target = $region37
    $region36: #{tpu_custom_call.1} parent=1 // pred_region
      %316 = dma.done [#allocation4], 256
    $region37: #{tpu_custom_call.1} parent=1 // pred_fallthru
      _
    %317 = vsyncpa [#allocation3], 1
    %318 = vsyncpa [#allocation6], 1
    %319 = vsyncpa [#allocation4], 1

</llo_original>
